<compile_context>
chip_gen: v7x
topology: tpu7x:2x2x1
jax: 0.10.0
libtpu: 0.0.40
codegen_flags: <defaults>
</compile_context>

<pallas_src>
import functools

import jax
import jax.numpy as jnp
from jax.experimental import pallas as pl
from jax.experimental.pallas import tpu as pltpu


# ----------------------------------------------------------------------------
# Pallas kernel: NAtt  (out[:, 0] = base + x[:, 0] * sigmoid(max_c x[:, c]))
# ----------------------------------------------------------------------------

def _natt_chunk(x_ref, b_ref, o_ref, j0, j1):
    """Process lanes [j0, j1) of the current block (all slices static)."""
    c = x_ref.shape[1]
    nf, rem = divmod(c, 8)

    # Running (bt, 8, lc) f32 max accumulator, element-wise per 8-channel chunk
    # (VPU only); one cross-sublane reduce at the very end.
    acc = None
    for i in range(nf):
        blk = x_ref[:, i * 8:(i + 1) * 8, j0:j1].astype(jnp.float32)
        acc = blk if acc is None else jnp.maximum(acc, blk)
    m = None if acc is None else jnp.max(acc, axis=1, keepdims=True)
    if rem:
        tail = jnp.max(x_ref[:, nf * 8:c, j0:j1].astype(jnp.float32),
                       axis=1, keepdims=True)
        m = tail if m is None else jnp.maximum(m, tail)

    # Gate channel 0 (re-read from VMEM, cheap) in f32; fuse the residual add.
    res = x_ref[:, 0:1, j0:j1].astype(jnp.float32) * jax.nn.sigmoid(m)
    if b_ref is not None:
        res = res + b_ref[:, :, j0:j1].astype(jnp.float32)
    o_ref[:, :, j0:j1] = res.astype(o_ref.dtype)


def _natt_kernel(x_ref, *rest, lane_chunk, fuse_base):
    if fuse_base:
        b_ref, o_ref = rest
    else:
        (o_ref,) = rest
        b_ref = None
    t = x_ref.shape[-1]
    # Static lane-chunk loop keeps vector intermediates vreg-sized (no multi-MiB
    # per-op VMEM round trips); chunk starts are multiples of 128.
    for j0 in range(0, t, lane_chunk):
        _natt_chunk(x_ref, b_ref, o_ref, j0, min(j0 + lane_chunk, t))


def _round_up(a, b):
    return (a + b - 1) // b * b


def _natt_pallas(x, base=None):
    N, C, H, W = x.shape
    HW = H * W
    itemsize = x.dtype.itemsize
    out_dtype = base.dtype if base is not None else x.dtype

    # Hardware VMEM capacity (generation-agnostic query; review item #3).
    vmem_cap = 64 << 20
    try:
        vmem_cap = int(pltpu.get_tpu_info().vmem_capacity_bytes)
    except Exception:  # pragma: no cover - defensive
        pass

    # 4-8 MiB input blocks on every generation (VMEM is not the constraint;
    # bigger blocks amortize the ~0.35us per-grid-step overhead).
    target_block_bytes = int(min(8 << 20, max(4 << 20, vmem_cap // 8)))

    # Batch rows per block (block sublane-dim constraint is on the last two
    # dims only, so any bt is legal for the (bt, C, tile) input block).
    bt = min(N, 8)
    n_b = pl.cdiv(N, bt)

    # In-kernel lane chunk: keep the (bt, 8, lc) f32 accumulator ~64 KiB.
    lc = max(128, ((64 << 10) // (bt * 8 * 4)) // 128 * 128)

    # Spatial tile (lane axis): 128-aligned, sized toward the target block,
    # at most 16 lane-chunks per block (bounds the in-kernel unroll).
    tile = (target_block_bytes // max(bt * C * itemsize, 1)) // 128 * 128
    tile = max(128, min(tile, 16 * lc))
    if tile >= HW:
        # Single spatial tile: exact (unpadded) extent -> always a legal block
        # shape; no padding / host copy for ragged H*W (review item #1).
        tile, n_s = HW, 1
    else:
        n_s = pl.cdiv(HW, tile)
        tile = _round_up(pl.cdiv(HW, n_s), 128)   # rebalance (review item #2)
        n_s = pl.cdiv(HW, tile)

    # Megacore: expose >=2 grid programs for non-trivial problems (item #4).
    total_bytes = N * C * HW * itemsize
    if n_b * n_s < 2 and total_bytes > (512 << 10) and HW > 128:
        tile = _round_up(pl.cdiv(HW, 2), 128)
        n_s = pl.cdiv(HW, tile)

    grid = (n_b, n_s)

    # VMEM budget / optional 3-deep input pipeline (review item #8).
    in_block = bt * C * tile * itemsize
    aux_block = 8 * tile * itemsize          # (bt,1,tile) blocks are 8x sublane padded
    n_aux = 1 + (1 if base is not None else 0)
    buffers = 2
    if (n_b * n_s >= 4 and
            3 * in_block + 2 * n_aux * aux_block + (4 << 20) <= (vmem_cap * 3) // 4):
        buffers = 3
    vmem_need = buffers * in_block + 2 * n_aux * aux_block + (4 << 20)
    vmem_limit = int(min(max(vmem_need, 32 << 20), (vmem_cap * 3) // 4))

    # Advisory cost estimate so XLA schedules the surrounding convs around it.
    cost = pl.CostEstimate(
        flops=int(N * HW * (C + 3)),
        transcendentals=int(N * HW),
        bytes_accessed=int((N * C * HW + n_aux * N * HW) * itemsize),
    )

    xf = x.reshape(N, C, HW)                 # free reshape (contiguous NCHW)
    args = [xf]

    x_spec_kwargs = {}
    if buffers != 2:
        x_spec_kwargs["pipeline_mode"] = pl.Buffered(buffers)
    in_specs = [pl.BlockSpec((bt, C, tile), lambda b, s: (b, 0, s), **x_spec_kwargs)]
    if base is not None:
        args.append(base.reshape(N, 1, HW))
        in_specs.append(pl.BlockSpec((bt, 1, tile), lambda b, s: (b, 0, s)))
    out_spec = pl.BlockSpec((bt, 1, tile), lambda b, s: (b, 0, s))

    kernel = functools.partial(_natt_kernel, lane_chunk=lc,
                               fuse_base=base is not None)

    out = pl.pallas_call(
        kernel,
        out_shape=jax.ShapeDtypeStruct((N, 1, HW), out_dtype),
        grid_spec=pltpu.PrefetchScalarGridSpec(
            num_scalar_prefetch=0,
            grid=grid,
            in_specs=in_specs,
            out_specs=out_spec,
        ),
        compiler_params=pltpu.CompilerParams(
            dimension_semantics=("parallel", "parallel"),
            vmem_limit_bytes=vmem_limit,
        ),
        cost_estimate=cost,
    )(*args)

    return out.reshape(N, 1, H, W)


def natt_reference(x):
    """Pure-jnp NAtt: x (N, C, H, W) -> x[:, :1] * sigmoid(max_c x)."""
    return x[:, 0:1, :, :] * jax.nn.sigmoid(jnp.max(x, axis=1, keepdims=True))


_PALLAS_MIN_BYTES = 256 << 10


def natt_forward(x, base=None, *, force_pallas=False):
    """NAtt (optionally fused with residual add `base + NAtt(x)`)."""
    N, C, H, W = x.shape
    nbytes = N * C * H * W * x.dtype.itemsize
    if not force_pallas and nbytes < _PALLAS_MIN_BYTES:
        # Tiny tensors: pallas_call launch overhead dominates (review item #9).
        out = natt_reference(x)
        return out if base is None else base + out
    return _natt_pallas(x, base)


# ----------------------------------------------------------------------------
# Full NRRN forward in JAX (convs via XLA), using the Pallas NAtt kernel
# ----------------------------------------------------------------------------

def conv3x3(x, wb):
    w, b = wb
    y = jax.lax.conv_general_dilated(
        x, w, window_strides=(1, 1), padding="SAME",
        dimension_numbers=("NCHW", "OIHW", "NCHW"))
    return y + b[None, :, None, None]


def feedback(x, y):
    # channel 0 of x is replaced by tanh(y); remaining channels pass through
    return jnp.concatenate([jnp.tanh(y), x[:, 1:, :, :]], axis=1)


def building_unit(p, input1, input2):
    prev_cell = jnp.tanh(input1)
    reset_gate = jax.nn.sigmoid(conv3x3(prev_cell, p["reset_a"]) +
                                conv3x3(input2, p["reset_b"]))
    update_gate = jax.nn.sigmoid(conv3x3(prev_cell, p["update_a"]) +
                                 conv3x3(input2, p["update_b"]))
    cell_gate = conv3x3(input2, p["g2_b"]) + reset_gate * conv3x3(prev_cell, p["g2_a"])
    hidden = update_gate * prev_cell + (1.0 - update_gate) * jnp.tanh(cell_gate)
    return hidden, prev_cell


def nrrn_forward(params, inp, natt_add_fn):
    """NRRN (bu_count building units): inp (N, 2, H, W) -> (N, 1, H, W).

    natt_add_fn(x, base) must return base + NAtt(x)  (residual add fused).
    """
    x0, x1 = inp[:, 0:1], inp[:, 1:2]
    n = x1.shape[0]
    x_updated = x1
    h = jax.nn.relu(conv3x3(jnp.concatenate([x0, x1], axis=0), params["conv1"]))
    memory, new_inp = h[:n], h[n:]
    for bu in params["bus"]:
        memory = conv3x3(memory, params["conv3"])
        hidden, memory = building_unit(bu, memory, new_inp)
        x_updated = natt_add_fn(hidden, x_updated)      # fused: x_upd += NAtt(hidden)
        new_inp = feedback(hidden, x_updated)
    new_inp = conv3x3(jax.nn.relu(new_inp), params["conv2"])
    x_updated = natt_add_fn(new_inp, x_updated)
    return x_updated


def init_params(key, hidden=64, bu_count=1):
    def conv_p(k, cin, cout):
        kw, kb = jax.random.split(k)
        return (0.1 * jax.random.normal(kw, (cout, cin, 3, 3), jnp.float32),
                0.01 * jax.random.normal(kb, (cout,), jnp.float32))

    keys = jax.random.split(key, 3 + 6 * bu_count)
    params = {
        "conv1": conv_p(keys[0], 1, hidden),
        "conv2": conv_p(keys[1], hidden, hidden),
        "conv3": conv_p(keys[2], hidden, hidden),
        "bus": [],
    }
    names = ["update_a", "update_b", "reset_a", "reset_b", "g2_a", "g2_b"]
    for i in range(bu_count):
        ks = keys[3 + 6 * i: 3 + 6 * (i + 1)]
        params["bus"].append({n: conv_p(k, hidden, hidden) for n, k in zip(names, ks)})
    return params


# ----------------------------------------------------------------------------

if __name__ == "__main__":
    key = jax.random.PRNGKey(0)
    k1, k2, k3, k4, k5, kp = jax.random.split(key, 6)

    # 1) NAtt Pallas kernel vs reference, small NCHW shape (forced Pallas path)
    x = jax.random.normal(k1, (2, 4, 16, 16), dtype=jnp.float32)
    out = jax.block_until_ready(natt_forward(x, force_pallas=True))
    assert out.shape == (2, 1, 16, 16)
    assert jnp.allclose(out, natt_reference(x), atol=1e-5, rtol=1e-5)

    # 2) ragged spatial size (10*12 = 120 lanes): exact-extent block, no pad copy
    xr = jax.random.normal(k2, (2, 3, 10, 12), dtype=jnp.float32)
    outr = jax.block_until_ready(natt_forward(xr, force_pallas=True))
    assert jnp.allclose(outr, natt_reference(xr), atol=1e-5, rtol=1e-5)

    # 3) fused residual add + multi-tile spatial grid (auto Pallas path, C=64)
    xb = jax.random.normal(k3, (2, 64, 64, 64), dtype=jnp.float32)
    bb = jax.random.normal(k4, (2, 1, 64, 64), dtype=jnp.float32)
    outb = jax.block_until_ready(natt_forward(xb, bb))
    assert jnp.allclose(outb, bb + natt_reference(xb), atol=1e-5, rtol=1e-5)

    # 4) bf16 input (kernel arithmetic is f32 internally)
    xh = jax.random.normal(k5, (2, 8, 32, 32), dtype=jnp.bfloat16)
    outh = jax.block_until_ready(natt_forward(xh, force_pallas=True))
    ref_h = natt_reference(xh.astype(jnp.float32)).astype(jnp.bfloat16)
    assert jnp.allclose(outh.astype(jnp.float32), ref_h.astype(jnp.float32), atol=0.1)

    # 5) full NRRN forward (bu_count=1, hidden=64) with the Pallas NAtt inside,
    #    checked against the same forward using the pure-jnp NAtt (+ add)
    params = init_params(kp, hidden=64, bu_count=1)
    inp = jax.random.normal(k3, (2, 2, 64, 64), dtype=jnp.float32)
    y_pallas = jax.block_until_ready(nrrn_forward(params, inp, natt_forward))
    y_ref = nrrn_forward(params, inp, lambda h, b: b + natt_reference(h))
    assert y_pallas.shape == (2, 1, 64, 64)
    assert jnp.allclose(y_pallas, y_ref, atol=1e-4, rtol=1e-4)

    print("KERNEL_OK")
</pallas_src>

<mosaic_0001>
module attributes {stable_mosaic.version = 11 : i64} {
  func.func @_natt_kernel(%arg0: i32, %arg1: i32, %arg2: memref<2x4x256xf32, #tpu.memory_space<vmem>>, %arg3: memref<2x1x256xf32, #tpu.memory_space<vmem>>) attributes {dimension_semantics = [#tpu.dimension_semantics<parallel>, #tpu.dimension_semantics<parallel>], iteration_bounds = array<i64: 1, 1>, scalar_prefetch = 0 : i64, scratch_operands = 0 : i64, tpu.core_type = #tpu.core_type<tc>, window_params = [{transform_indices = @transform_0, window_bounds = array<i64: 2, 4, 256>}, {transform_indices = @transform_1, window_bounds = array<i64: 2, 1, 256>}]} {
    %c0 = arith.constant 0 : index
    %c0_0 = arith.constant 0 : index
    %c0_1 = arith.constant 0 : index
    %0 = vector.load %arg2[%c0, %c0_0, %c0_1] : memref<2x4x256xf32, #tpu.memory_space<vmem>>, vector<2x4x256xf32>
    %cst = arith.constant dense<0xFF800000> : vector<2x256xf32>
    %1 = vector.multi_reduction <maximumf>, %0, %cst [1] : vector<2x4x256xf32> to vector<2x256xf32>
    %2 = vector.shape_cast %1 : vector<2x256xf32> to vector<2x1x256xf32>
    %c0_2 = arith.constant 0 : index
    %c0_3 = arith.constant 0 : index
    %c0_4 = arith.constant 0 : index
    %3 = vector.load %arg2[%c0_2, %c0_3, %c0_4] : memref<2x4x256xf32, #tpu.memory_space<vmem>>, vector<2x1x256xf32>
    %4 = arith.negf %2 : vector<2x1x256xf32>
    %5 = math.exp %4 : vector<2x1x256xf32>
    %cst_5 = arith.constant 1.000000e+00 : f32
    %6 = vector.broadcast %cst_5 : f32 to vector<2x1x256xf32>
    %7 = arith.addf %6, %5 : vector<2x1x256xf32>
    %8 = arith.divf %6, %7 : vector<2x1x256xf32>
    %9 = arith.mulf %3, %8 : vector<2x1x256xf32>
    %c0_6 = arith.constant 0 : index
    %c0_7 = arith.constant 0 : index
    %c0_8 = arith.constant 0 : index
    %10 = vector.load %arg3[%c0_6, %c0_7, %c0_8] : memref<2x1x256xf32, #tpu.memory_space<vmem>>, vector<2x1x256xf32>
    tpu.vector_store %arg3[%c0_6, %c0_7, %c0_8], %9 {strides = array<i32>} : memref<2x1x256xf32, #tpu.memory_space<vmem>>, vector<2x1x256xf32>,
    return
  }
  func.func @transform_0(%arg0: i32, %arg1: i32) -> (i32, i32, i32) {
    %c0_i32 = arith.constant 0 : i32
    %c0_i32_0 = arith.constant 0 : i32
    return %arg0, %c0_i32, %arg1 : i32, i32, i32
  }
  func.func @transform_1(%arg0: i32, %arg1: i32) -> (i32, i32, i32) {
    %c0_i32 = arith.constant 0 : i32
    %c0_i32_0 = arith.constant 0 : i32
    return %arg0, %c0_i32, %arg1 : i32, i32, i32
  }
}

</mosaic_0001>

<llo_original>
// kernel: tpu_custom_call.1
$region0: #{tpu_custom_call.1}
  #allocation0 [shape = 'u32[]', space=smem, size = 0x4, offset = 0x4, fixed_abs, tag = 'smem constant byte address 0x4 - core index']
  #allocation1 [shape = 'u32[144,128]{1,0:T(1,128)}', space=vmem, size = 0x12000, scoped, tag = 'internal scratch']
  %s0 = inlined_call_operand.hbm [shape: f32[2,4,256], index: 0, kind: input, shape index: {}]
  %s1 = inlined_call_operand.hbm [shape: f32[2,1,256], index: 1, kind: output, shape index: {}]
  %s2 = sld [smem:[#allocation0]]
  $region18: #{tpu_custom_call.1} parent=0
    _
  %s4 = ssub.s32 1, %s2
  %s5 = scalar_select 0, %s4, %s2
  $region1: #{tpu_custom_call.1} parent=0
    #allocation2 [shape = 'u8[8192]{0}', space=vmem, size = 0x2000, scoped, tag = 'input window, operand 0, single buffered']
    #allocation3 [shape = 's32[1]{0}', space=sflag, size = 0x4, scoped, tag = 'scoped memory for tpu_custom_call.1']
    #allocation4 [shape = 's32[1]{0}', space=sflag, size = 0x4, scoped, tag = 'scoped memory for tpu_custom_call.1']
    #allocation5 [shape = 'u8[2048]{0}', space=vmem, size = 0x800, scoped, tag = 'output window, operand 0, single buffered']
    %6 = vsyncpa [#allocation3], 0
    %7 = vsyncpa [#allocation4], 0
    // Predicated region
    $region2: #{tpu_custom_call.1} parent=1 // pred_check
      _
    $region3: #{tpu_custom_call.1} parent=1 // pred_check_branch
      %9 = sbr.rel (0) target = $region5
    $region4: #{tpu_custom_call.1} parent=1 // pred_region
      %s11 = ssub.s32 256, 256
      %12 = vsyncadd [#allocation3], %s11
      %s13 = sshll.u32 [#allocation2], 4
      %s14 = int_to_ptr.vmem [resolvable:$true] %s13
      %19 = dma.hbm_to_vmem [thread:$0]  %s0, 256, %s14, [#allocation3], 128, 128, 8
    $region5: #{tpu_custom_call.1} parent=1 // pred_fallthru
      _
    // Predicated region
    $region6: #{tpu_custom_call.1} parent=1 // pred_check
      _
    $region7: #{tpu_custom_call.1} parent=1 // pred_check_branch
      %21 = sbr.rel (0) target = $region9
    $region8: #{tpu_custom_call.1} parent=1 // pred_region
      %22 = dma.done [#allocation3], 256
    $region9: #{tpu_custom_call.1} parent=1 // pred_fallthru
      _
    %v23 = vld [vmem:[#allocation2] sm:$0xff]
    %v24 = vld [vmem:[#allocation2 + $0x8] sm:$0xff]
    %v27 = vcombine.high %v23, %v23
    %v28 = vcombine.high %v24, %v24
    %vm31 = vcmask 1043456
    %v32 = vsel %vm31, %v23, -inf
    %v33 = vrot.slane %v32, 4
    %v34 = vmax.f32 %v32, %v33
    %v35 = vrot.slane %v34, 2
    %v36 = vmax.f32 %v34, %v35
    %v37 = vrot.slane %v36, 1
    %v38 = vmax.f32 %v36, %v37
    %v39 = vsel %vm31, %v27, -inf
    %v40 = vrot.slane %v39, 4
    %v41 = vmax.f32 %v39, %v40
    %v42 = vrot.slane %v41, 2
    %v43 = vmax.f32 %v41, %v42
    %v44 = vrot.slane %v43, 1
    %v45 = vmax.f32 %v43, %v44
    %v46 = vsel %vm31, %v24, -inf
    %v47 = vrot.slane %v46, 4
    %v48 = vmax.f32 %v46, %v47
    %v49 = vrot.slane %v48, 2
    %v50 = vmax.f32 %v48, %v49
    %v51 = vrot.slane %v50, 1
    %v52 = vmax.f32 %v50, %v51
    %v53 = vsel %vm31, %v28, -inf
    %v54 = vrot.slane %v53, 4
    %v55 = vmax.f32 %v53, %v54
    %v56 = vrot.slane %v55, 2
    %v57 = vmax.f32 %v55, %v56
    %v58 = vrot.slane %v57, 1
    %v59 = vmax.f32 %v57, %v58
    %v60 = vld [vmem:[#allocation2] ss:$4 sm:$0x3]
    %s61 = scalar_lea.vmem [#allocation2], 8
    %v62 = vld [vmem:[%s61] ss:$4 sm:$0x3]
    %v63 = vxor.u32 %v38, 2147483648
    %v64 = vxor.u32 %v45, 2147483648
    %v65 = vxor.u32 %v52, 2147483648
    %v66 = vxor.u32 %v59, 2147483648
    %v67 = vmul.f32 %v63, 1.442695
    %v68 = vpow.pop %v67
    %v69 = vmul.f32 %v64, 1.442695
    %v70 = vpow.pop %v69
    %v71 = vmul.f32 %v65, 1.442695
    %v72 = vpow.pop %v71
    %v73 = vmul.f32 %v66, 1.442695
    %v74 = vpow.pop %v73
    %v75 = vadd.f32 %v68, 1.0
    %v76 = vadd.f32 %v70, 1.0
    %v77 = vadd.f32 %v72, 1.0
    %v78 = vadd.f32 %v74, 1.0
    %v79 = vrcp.pop %v75
    %v80 = vmul.f32 1.0, %v79
    %v81 = vrcp.pop %v76
    %v82 = vmul.f32 1.0, %v81
    %v83 = vrcp.pop %v77
    %v84 = vmul.f32 1.0, %v83
    %v85 = vrcp.pop %v78
    %v86 = vmul.f32 1.0, %v85
    %v91 = vcombine.low %v80, %v82
    %v93 = vunpack.c.l.s4 1966171168
    %v94 = vunpack.c.0.s8 %v93
    %v95 = vlaneseq
    %v96 = vshrl.u32 %v95, 7
    %v97 = vsub.s32 %v94, %v96
    %v98 = vrot.slane %v91, %v97
    %v100 = vunpack.c.l.s4 1966171168
    %v101 = vunpack.c.0.s8 %v100
    %v102 = vlaneseq
    %v103 = vshrl.u32 %v102, 7
    %v104 = vsub.s32 %v101, %v103
    %v105 = vrot.slane %v98, %v104
    %v106 = vcombine.low %v84, %v86
    %v108 = vunpack.c.l.s4 1966171168
    %v109 = vunpack.c.0.s8 %v108
    %v110 = vlaneseq
    %v111 = vshrl.u32 %v110, 7
    %v112 = vsub.s32 %v109, %v111
    %v113 = vrot.slane %v106, %v112
    %v115 = vunpack.c.l.s4 1966171168
    %v116 = vunpack.c.0.s8 %v115
    %v117 = vlaneseq
    %v118 = vshrl.u32 %v117, 7
    %v119 = vsub.s32 %v116, %v118
    %v120 = vrot.slane %v113, %v119
    %v123 = vmul.f32 %v60, %v105
    %v124 = vmul.f32 %v62, %v120
    %v125 = vlaneseq
    %vm126 = vcmp.ge.s32.totalorder %v125, 0
    %vm127 = vcmp.lt.s32.totalorder %v125, 256
    %vm128 = vmand %vm126, %vm127
    %129 = vst.msk [vmem:[#allocation5] sm:$0x3] %vm128, %v123
    %130 = vst.msk [vmem:[#allocation5 + $0x2] sm:$0x3] %vm128, %v124
    // Predicated region
    $region10: #{tpu_custom_call.1} parent=1 // pred_check
      _
    $region11: #{tpu_custom_call.1} parent=1 // pred_check_branch
      %132 = sbr.rel (0) target = $region13
    $region12: #{tpu_custom_call.1} parent=1 // pred_region
      %s134 = ssub.s32 64, 64
      %135 = vsyncadd [#allocation4], %s134
      %s136 = sshll.u32 [#allocation5], 4
      %s137 = int_to_ptr.vmem [resolvable:$true] %s136
      %142 = dma.vmem_to_hbm [thread:$0]  %s137, 64, %s1, [#allocation4], 32, 32, 2
    $region13: #{tpu_custom_call.1} parent=1 // pred_fallthru
      _
    // Predicated region
    $region14: #{tpu_custom_call.1} parent=1 // pred_check
      _
    $region15: #{tpu_custom_call.1} parent=1 // pred_check_branch
      %144 = sbr.rel (0) target = $region17
    $region16: #{tpu_custom_call.1} parent=1 // pred_region
      %145 = dma.done [#allocation4], 64
    $region17: #{tpu_custom_call.1} parent=1 // pred_fallthru
      _
    %146 = vsyncpa [#allocation3], 1
    %147 = vsyncpa [#allocation4], 1

</llo_original>
